<compile_context>
chip_gen: v7x
topology: tpu7x:2x2x1
jax: 0.10.0
libtpu: 0.0.40
codegen_flags: <defaults>
</compile_context>

<pallas_src>
import jax
import jax.numpy as jnp
from jax.experimental import pallas as pl
from jax.experimental.pallas import tpu as pltpu


def _basic_block_kernel(xp_ref, w1_ref, b1_ref, w2_ref, b2_ref, out_ref):
    # xp_ref : (1, H+4, W*C)  lane-dense input, pre-padded by 2 zero rows top/bottom
    # w1_ref : (W*C, 3*W*C)   banded conv1 weights (BN1 scale folded), matmul dtype
    # b1_ref : (1, W*C)       folded BN1 bias, tiled over w (f32)
    # w2_ref : (W*C, 3*W*C)   banded conv2 weights (BN2 scale folded)
    # b2_ref : (1, W*C)       folded BN2 bias (f32)
    # out_ref: (1, H, W*C)    lane-dense output
    Hp4 = xp_ref.shape[1]
    WC = xp_ref.shape[2]
    H = Hp4 - 4
    cdt = w1_ref.dtype                      # matmul operand dtype (f32 or bf16)

    x_all = xp_ref[0]                       # (H+4, W*C) f32, loaded once

    # ---- conv1 + BN1 + ReLU -------------------------------------------------
    # One lane-dense matmul; width taps + BN scale are inside w1. Height taps
    # (kh = 0,1,2) become three aligned static row slices of the result.
    y1 = jnp.dot(x_all.astype(cdt), w1_ref[...],
                 preferred_element_type=jnp.float32)            # (H+4, 3*W*C)
    c1 = (y1[0:H + 2, 0:WC]
          + y1[1:H + 3, WC:2 * WC]
          + y1[2:H + 4, 2 * WC:3 * WC])                         # (H+2, W*C)
    h1 = jnp.maximum(c1 + b1_ref[...], 0.0)                     # bias + ReLU (f32)

    # Rows 0 and H+1 of h1 are the zero-padding ring conv2 needs; force them to
    # zero (conv1 evaluated outside the image is not zero in general).
    row = jax.lax.broadcasted_iota(jnp.int32, (H + 2, WC), 0)
    h1 = jnp.where((row >= 1) & (row <= H), h1, 0.0)

    # ---- conv2 + BN2 --------------------------------------------------------
    y2 = jnp.dot(h1.astype(cdt), w2_ref[...],
                 preferred_element_type=jnp.float32)            # (H+2, 3*W*C)
    c2 = (y2[0:H, 0:WC]
          + y2[1:H + 1, WC:2 * WC]
          + y2[2:H + 2, 2 * WC:3 * WC])                         # (H, W*C)

    # ---- residual add + ReLU (f32, lane-dense, aligned) ---------------------
    identity = x_all[2:2 + H, :]
    out_ref[0] = jnp.maximum(c2 + b2_ref[...] + identity, 0.0)


def _banded_weight(w_oihw, scale, W, matmul_dtype):
    """Build the (W*Cin, 3*W*Cout) block-banded matrix for one 3x3 conv.

    Column block kh holds the width-tap (kw) banded matrix for kernel row kh;
    the per-output-channel BN scale is folded in. Zero padding along W is
    encoded by clipping the band at the image edges.
    """
    Cout, Cin, KH, KW = w_oihw.shape
    assert KH == 3 and KW == 3
    wk = jnp.transpose(w_oihw.astype(jnp.float32), (2, 3, 1, 0))     # (kh,kw,ci,co)
    wk = wk * scale.astype(jnp.float32)[None, None, None, :]         # fold BN scale
    w_in = jnp.arange(W)[None, :, None]                              # (1,W,1)
    w_out = jnp.arange(W)[None, None, :]                             # (1,1,W)
    kw = jnp.arange(3)[:, None, None]                                # (3,1,1)
    sel = (w_in == w_out + kw - 1).astype(jnp.float32)               # (kw,Win,Wout)
    # m[kh, w_in, ci, w_out, co] = sum_kw sel[kw,w_in,w_out] * wk[kh,kw,ci,co]
    m = jnp.einsum('xiw,yxab->yiawb', sel, wk)                       # (3,W,Cin,W,Cout)
    m = jnp.transpose(m, (1, 2, 0, 3, 4)).reshape(W * Cin, 3 * W * Cout)
    return m.astype(matmul_dtype)


def basic_block_pallas(x_nchw, w1_oihw, g1, be1, m1, v1,
                       w2_oihw, g2, be2, m2, v2,
                       eps=1e-5, matmul_dtype=jnp.bfloat16):
    """BasicBlock forward (stride=1, downsample=None). x_nchw: (N, C, H, W)."""
    N, Cin, H, W = x_nchw.shape
    Cout = w1_oihw.shape[0]
    assert Cin == Cout, "residual add requires inplanes == planes (no downsample)"
    WC = W * Cout

    # Fold eval-mode BatchNorm into per-channel scale (into weights) + bias.
    s1 = g1 / jnp.sqrt(v1 + eps)
    b1 = be1 - m1 * s1
    s2 = g2 / jnp.sqrt(v2 + eps)
    b2 = be2 - m2 * s2

    w1m = _banded_weight(w1_oihw, s1, W, matmul_dtype)        # (W*C, 3*W*C)
    w2m = _banded_weight(w2_oihw, s2, W, matmul_dtype)        # (W*C, 3*W*C)
    b1d = jnp.tile(b1, W).reshape(1, WC).astype(jnp.float32)  # lane = w*C + c
    b2d = jnp.tile(b2, W).reshape(1, WC).astype(jnp.float32)

    # NCHW -> lane-dense (N, H, W*C); pad 2 zero rows top/bottom so both convs'
    # height taps are plain static row slices inside the kernel.
    x_dense = jnp.transpose(x_nchw, (0, 2, 3, 1)).reshape(N, H, WC)
    x_dense = x_dense.astype(jnp.float32)
    x_pad = jnp.pad(x_dense, ((0, 0), (2, 2), (0, 0)))

    out = pl.pallas_call(
        _basic_block_kernel,
        out_shape=jax.ShapeDtypeStruct((N, H, WC), jnp.float32),
        grid_spec=pltpu.PrefetchScalarGridSpec(
            num_scalar_prefetch=0,
            grid=(N,),
            in_specs=[
                pl.BlockSpec((1, H + 4, WC), lambda n: (n, 0, 0)),
                pl.BlockSpec((WC, 3 * WC), lambda n: (0, 0)),
                pl.BlockSpec((1, WC), lambda n: (0, 0)),
                pl.BlockSpec((WC, 3 * WC), lambda n: (0, 0)),
                pl.BlockSpec((1, WC), lambda n: (0, 0)),
            ],
            out_specs=pl.BlockSpec((1, H, WC), lambda n: (n, 0, 0)),
        ),
        compiler_params=pltpu.CompilerParams(
            dimension_semantics=("parallel",)),
    )(x_pad, w1m, b1d, w2m, b2d)

    # lane-dense (N, H, W*C) -> NCHW
    return jnp.transpose(out.reshape(N, H, W, Cout), (0, 3, 1, 2))


def _reference(x, w1, g1, be1, m1, v1, w2, g2, be2, m2, v2, eps=1e-5):
    """Plain-JAX reference (matches PyTorch eval-mode BasicBlock)."""
    def conv(xx, w):
        return jax.lax.conv_general_dilated(
            xx, w, window_strides=(1, 1), padding=((1, 1), (1, 1)),
            dimension_numbers=('NCHW', 'OIHW', 'NCHW'))

    def bn(xx, g, b, m, v):
        g = g[None, :, None, None]; b = b[None, :, None, None]
        m = m[None, :, None, None]; v = v[None, :, None, None]
        return (xx - m) / jnp.sqrt(v + eps) * g + b

    out = jax.nn.relu(bn(conv(x, w1), g1, be1, m1, v1))
    out = bn(conv(out, w2), g2, be2, m2, v2)
    return jax.nn.relu(out + x)


if __name__ == "__main__":
    # small shapes: batch=2, inplanes=planes=8, spatial=16 (stride=1, no downsample)
    N, C, H, W = 2, 8, 16, 16
    key = jax.random.PRNGKey(0)
    ks = jax.random.split(key, 8)

    x = jax.random.normal(ks[0], (N, C, H, W), jnp.float32)

    w1 = jax.random.normal(ks[1], (C, C, 3, 3), jnp.float32) * 0.1  # OIHW
    w2 = jax.random.normal(ks[2], (C, C, 3, 3), jnp.float32) * 0.1  # OIHW

    g1 = 1.0 + 0.1 * jax.random.normal(ks[3], (C,), jnp.float32)
    be1 = 0.1 * jax.random.normal(ks[4], (C,), jnp.float32)
    m1 = 0.1 * jax.random.normal(ks[5], (C,), jnp.float32)
    v1 = jnp.abs(jax.random.normal(ks[6], (C,), jnp.float32)) + 0.5

    g2 = 1.0 + 0.1 * jax.random.normal(ks[7], (C,), jnp.float32)
    be2 = 0.05 * jnp.arange(C, dtype=jnp.float32)
    m2 = 0.02 * jnp.arange(C, dtype=jnp.float32)
    v2 = 1.0 + 0.1 * jnp.arange(C, dtype=jnp.float32)

    ref = _reference(x, w1, g1, be1, m1, v1, w2, g2, be2, m2, v2)

    # 1) exact-math configuration (f32 matmul operands) -> tight tolerance
    out_f32 = jax.block_until_ready(
        basic_block_pallas(x, w1, g1, be1, m1, v1, w2, g2, be2, m2, v2,
                           matmul_dtype=jnp.float32))
    assert out_f32.shape == ref.shape == (N, C, H, W)
    assert jnp.allclose(out_f32, ref, rtol=1e-4, atol=1e-4), "f32 kernel mismatch"

    # 2) performance configuration (bf16 MXU operands, f32 accumulate/epilogue)
    out_bf16 = jax.block_until_ready(
        basic_block_pallas(x, w1, g1, be1, m1, v1, w2, g2, be2, m2, v2,
                           matmul_dtype=jnp.bfloat16))
    assert jnp.allclose(out_bf16, ref, rtol=5e-2, atol=5e-2), "bf16 kernel mismatch"

    print("KERNEL_OK")
</pallas_src>

<mosaic_0001>
module attributes {stable_mosaic.version = 11 : i64} {
  func.func @_basic_block_kernel(%arg0: i32, %arg1: memref<1x20x128xf32, #tpu.memory_space<vmem>>, %arg2: memref<128x384xf32, #tpu.memory_space<vmem>>, %arg3: memref<1x128xf32, #tpu.memory_space<vmem>>, %arg4: memref<128x384xf32, #tpu.memory_space<vmem>>, %arg5: memref<1x128xf32, #tpu.memory_space<vmem>>, %arg6: memref<1x16x128xf32, #tpu.memory_space<vmem>>) attributes {dimension_semantics = [#tpu.dimension_semantics<parallel>], iteration_bounds = array<i64: 2>, scalar_prefetch = 0 : i64, scratch_operands = 0 : i64, tpu.core_type = #tpu.core_type<tc>, window_params = [{transform_indices = @transform_0, window_bounds = array<i64: 1, 20, 128>}, {pipeline_mode = #tpu.pipeline_mode<synchronous>, transform_indices = @transform_1, window_bounds = array<i64: 128, 384>}, {pipeline_mode = #tpu.pipeline_mode<synchronous>, transform_indices = @transform_2, window_bounds = array<i64: 1, 128>}, {pipeline_mode = #tpu.pipeline_mode<synchronous>, transform_indices = @transform_3, window_bounds = array<i64: 128, 384>}, {pipeline_mode = #tpu.pipeline_mode<synchronous>, transform_indices = @transform_4, window_bounds = array<i64: 1, 128>}, {transform_indices = @transform_5, window_bounds = array<i64: 1, 16, 128>}]} {
    %c0 = arith.constant 0 : index
    %c0_0 = arith.constant 0 : index
    %c0_1 = arith.constant 0 : index
    %0 = vector.load %arg1[%c0, %c0_0, %c0_1] : memref<1x20x128xf32, #tpu.memory_space<vmem>>, vector<1x20x128xf32>
    %1 = vector.shape_cast %0 : vector<1x20x128xf32> to vector<20x128xf32>
    %c0_2 = arith.constant 0 : index
    %c0_3 = arith.constant 0 : index
    %2 = vector.load %arg2[%c0_2, %c0_3] : memref<128x384xf32, #tpu.memory_space<vmem>>, vector<128x384xf32>
    %cst = arith.constant dense<0.000000e+00> : vector<20x384xf32>
    %3 = tpu.matmul %1, %2, %cst {dimension_numbers = #tpu.dot_dimension_numbers<[1], [0], [0], [1], [0, 0, 1, 1], [], []>} : vector<20x128xf32>, vector<128x384xf32>, vector<20x384xf32> -> vector<20x384xf32>
    %4 = vector.extract_strided_slice %3 {offsets = [0, 0], sizes = [18, 128], strides = [1, 1]} : vector<20x384xf32> to vector<18x128xf32>
    %5 = vector.extract_strided_slice %3 {offsets = [1, 128], sizes = [18, 128], strides = [1, 1]} : vector<20x384xf32> to vector<18x128xf32>
    %6 = arith.addf %4, %5 : vector<18x128xf32>
    %7 = vector.extract_strided_slice %3 {offsets = [2, 256], sizes = [18, 128], strides = [1, 1]} : vector<20x384xf32> to vector<18x128xf32>
    %8 = arith.addf %6, %7 : vector<18x128xf32>
    %c0_4 = arith.constant 0 : index
    %c0_5 = arith.constant 0 : index
    %9 = vector.load %arg3[%c0_4, %c0_5] : memref<1x128xf32, #tpu.memory_space<vmem>>, vector<1x128xf32>
    %10 = vector.broadcast %9 : vector<1x128xf32> to vector<18x128xf32>
    %11 = arith.addf %8, %10 : vector<18x128xf32>
    %cst_6 = arith.constant 0.000000e+00 : f32
    %12 = vector.broadcast %cst_6 : f32 to vector<18x128xf32>
    %13 = arith.maximumf %11, %12 : vector<18x128xf32>
    %14 = tpu.iota {dimensions = array<i32: 0>} : vector<18x128xi32>
    %c1_i32 = arith.constant 1 : i32
    %15 = vector.broadcast %c1_i32 : i32 to vector<18x128xi32>
    %16 = arith.cmpi sge, %14, %15 : vector<18x128xi32>
    %c16_i32 = arith.constant 16 : i32
    %17 = vector.broadcast %c16_i32 : i32 to vector<18x128xi32>
    %18 = arith.cmpi sle, %14, %17 : vector<18x128xi32>
    %19 = arith.andi %16, %18 : vector<18x128xi1>
    %cst_7 = arith.constant 0.000000e+00 : f32
    %20 = vector.broadcast %cst_7 : f32 to vector<18x128xf32>
    %21 = arith.select %19, %13, %20 : vector<18x128xi1>, vector<18x128xf32>
    %c0_8 = arith.constant 0 : index
    %c0_9 = arith.constant 0 : index
    %22 = vector.load %arg4[%c0_8, %c0_9] : memref<128x384xf32, #tpu.memory_space<vmem>>, vector<128x384xf32>
    %cst_10 = arith.constant dense<0.000000e+00> : vector<18x384xf32>
    %23 = tpu.matmul %21, %22, %cst_10 {dimension_numbers = #tpu.dot_dimension_numbers<[1], [0], [0], [1], [0, 0, 1, 1], [], []>} : vector<18x128xf32>, vector<128x384xf32>, vector<18x384xf32> -> vector<18x384xf32>
    %24 = vector.extract_strided_slice %23 {offsets = [0, 0], sizes = [16, 128], strides = [1, 1]} : vector<18x384xf32> to vector<16x128xf32>
    %25 = vector.extract_strided_slice %23 {offsets = [1, 128], sizes = [16, 128], strides = [1, 1]} : vector<18x384xf32> to vector<16x128xf32>
    %26 = arith.addf %24, %25 : vector<16x128xf32>
    %27 = vector.extract_strided_slice %23 {offsets = [2, 256], sizes = [16, 128], strides = [1, 1]} : vector<18x384xf32> to vector<16x128xf32>
    %28 = arith.addf %26, %27 : vector<16x128xf32>
    %29 = vector.extract_strided_slice %1 {offsets = [2, 0], sizes = [16, 128], strides = [1, 1]} : vector<20x128xf32> to vector<16x128xf32>
    %c0_11 = arith.constant 0 : index
    %c0_12 = arith.constant 0 : index
    %30 = vector.load %arg5[%c0_11, %c0_12] : memref<1x128xf32, #tpu.memory_space<vmem>>, vector<1x128xf32>
    %31 = vector.broadcast %30 : vector<1x128xf32> to vector<16x128xf32>
    %32 = arith.addf %28, %31 : vector<16x128xf32>
    %33 = arith.addf %32, %29 : vector<16x128xf32>
    %cst_13 = arith.constant 0.000000e+00 : f32
    %34 = vector.broadcast %cst_13 : f32 to vector<16x128xf32>
    %35 = arith.maximumf %33, %34 : vector<16x128xf32>
    %c0_14 = arith.constant 0 : index
    %c0_15 = arith.constant 0 : index
    %c0_16 = arith.constant 0 : index
    %36 = vector.load %arg6[%c0_14, %c0_15, %c0_16] : memref<1x16x128xf32, #tpu.memory_space<vmem>>, vector<1x16x128xf32>
    %37 = vector.shape_cast %36 : vector<1x16x128xf32> to vector<16x128xf32>
    %38 = vector.shape_cast %35 : vector<16x128xf32> to vector<1x16x128xf32>
    tpu.vector_store %arg6[%c0_14, %c0_15, %c0_16], %38 {strides = array<i32>} : memref<1x16x128xf32, #tpu.memory_space<vmem>>, vector<1x16x128xf32>,
    return
  }
  func.func @transform_0(%arg0: i32) -> (i32, i32, i32) {
    %c0_i32 = arith.constant 0 : i32
    %c0_i32_0 = arith.constant 0 : i32
    %c0_i32_1 = arith.constant 0 : i32
    return %arg0, %c0_i32, %c0_i32_0 : i32, i32, i32
  }
  func.func @transform_1(%arg0: i32) -> (i32, i32) {
    %c0_i32 = arith.constant 0 : i32
    %c0_i32_0 = arith.constant 0 : i32
    %c0_i32_1 = arith.constant 0 : i32
    return %c0_i32, %c0_i32_0 : i32, i32
  }
  func.func @transform_2(%arg0: i32) -> (i32, i32) {
    %c0_i32 = arith.constant 0 : i32
    %c0_i32_0 = arith.constant 0 : i32
    %c0_i32_1 = arith.constant 0 : i32
    return %c0_i32, %c0_i32_0 : i32, i32
  }
  func.func @transform_3(%arg0: i32) -> (i32, i32) {
    %c0_i32 = arith.constant 0 : i32
    %c0_i32_0 = arith.constant 0 : i32
    %c0_i32_1 = arith.constant 0 : i32
    return %c0_i32, %c0_i32_0 : i32, i32
  }
  func.func @transform_4(%arg0: i32) -> (i32, i32) {
    %c0_i32 = arith.constant 0 : i32
    %c0_i32_0 = arith.constant 0 : i32
    %c0_i32_1 = arith.constant 0 : i32
    return %c0_i32, %c0_i32_0 : i32, i32
  }
  func.func @transform_5(%arg0: i32) -> (i32, i32, i32) {
    %c0_i32 = arith.constant 0 : i32
    %c0_i32_0 = arith.constant 0 : i32
    %c0_i32_1 = arith.constant 0 : i32
    return %arg0, %c0_i32, %c0_i32_0 : i32, i32, i32
  }
}

</mosaic_0001>

<llo_original>
// kernel: tpu_custom_call.1
$region0: #{tpu_custom_call.1}
  #allocation0 [shape = 'u32[]', space=smem, size = 0x4, offset = 0x4, fixed_abs, tag = 'smem constant byte address 0x4 - core index']
  #allocation1 [shape = 'u32[144,128]{1,0:T(1,128)}', space=vmem, size = 0x12000, scoped, tag = 'internal scratch']
  %s0 = inlined_call_operand.vmem [shape: f32[2,20,128], index: 0, kind: input, shape index: {}]
  %s1 = inlined_call_operand.hbm [shape: f32[128,384], index: 1, kind: input, shape index: {}]
  %s2 = inlined_call_operand.vmem [shape: f32[1,128], index: 2, kind: input, shape index: {}]
  %s3 = inlined_call_operand.hbm [shape: f32[128,384], index: 3, kind: input, shape index: {}]
  %s4 = inlined_call_operand.vmem [shape: f32[1,128], index: 4, kind: input, shape index: {}]
  %s5 = inlined_call_operand.hbm [shape: f32[2,16,128], index: 5, kind: output, shape index: {}]
  %s6 = sld [smem:[#allocation0]]
  $region61: #{tpu_custom_call.1} parent=0
    _
  %s8 = ssub.s32 1, %s6
  %s9 = scalar_select 0, %s8, %s6
  $region1: #{tpu_custom_call.1} parent=0
    #allocation2 [shape = 'u8[196608]{0}', space=vmem, size = 0x30000, scoped, tag = 'input window, operand 1, single buffered']
    #allocation3 [shape = 's32[2]{0}', space=sflag, size = 0x8, scoped, tag = 'scoped memory for tpu_custom_call.1']
    #allocation4 [shape = 's32[2]{0}', space=sflag, size = 0x8, scoped, tag = 'scoped memory for tpu_custom_call.1']
    #allocation5 [shape = 'u8[196608]{0}', space=vmem, size = 0x30000, scoped, tag = 'input window, operand 3, single buffered']
    #allocation6 [shape = 's32[1]{0}', space=sflag, size = 0x4, scoped, tag = 'scoped memory for tpu_custom_call.1']
    #allocation7 [shape = 'u8[16384]{0}', space=vmem, size = 0x4000, scoped, tag = 'output window, operand 0']
    %10 = vsyncpa [#allocation3], 0
    %11 = vsyncpa [#allocation6], 0
    %12 = vsyncpa [#allocation4], 0
    %s13 = scalar_lea.sflag [#allocation4], 1
    %14 = vsyncpa %s13, 0
    loop: start=0, step=1, limit=4
    $region2: #{tpu_custom_call.1} parent=1 // loop_pre_header
      _
    $region3: #{tpu_custom_call.1} parent=1 // loop_header
      %s16 = sphi 0, %s20
      %p17 = scmp.ge.s32.totalorder %s16, 4
      %s26 = sphi 0, %s28
      %s29 = sphi 0, %s26
      %s30 = sphi 0, %s29
      %s46 = sphi 0, %s30
      %s50 = sphi 0, %s50
      %s52 = sphi 0, %s50
      %s53 = sphi 0, %s52
      %s67 = sphi 0, %s53
      %s71 = sphi 0, %s71
      %s73 = sphi 0, %s71
      %s74 = sphi 0, %s73
      %s88 = sphi 0, %s74
      %s92 = sphi 0, %s92
      %s94 = sphi 0, %s92
      %s95 = sphi 0, %s94
      %s109 = sphi 0, %s95
      %s113 = sphi 0, %s113
      %s115 = sphi 0, %s113
      %s116 = sphi 0, %s115
      %s130 = sphi 0, %s116
      %s136 = sphi 0, %s138
      %s139 = sphi 0, %s136
      %s140 = sphi 0, %s139
      %s156 = sphi 0, %s140
    $region4: #{tpu_custom_call.1} parent=1 // loop_header_branch
      %19 = sbr.rel (%p17) target = $region8
    $region5: #{tpu_custom_call.1} parent=1 // loop_body
      %s21 = ssub.s32 %s16, 1
      %s22 = ssub.s32 %s16, 2
      %s23 = sadd.s32 %s16, 1
      %s24 = ssub.s32 %s16, %s23
      %p25 = scmp.eq.s32.totalorder %s24, 0
      %s27 = sadd.s32 %s26, 1
      %s28 = scalar_select %p25, %s26, %s27
      %p31 = pneg %p25
      %p32 = scmp.eq.s32.totalorder %s16, 1
      %p33 = por %p31, %p32
      %p34 = scmp.ne.s32.totalorder %s26, %s29
      %p35 = scmp.eq.s32.totalorder %s16, 0
      %p36 = por %p34, %p35
      %p37 = scmp.ne.s32.totalorder %s26, %s29
      %p38 = scmp.eq.s32.totalorder %s21, 1
      %p39 = por %p37, %p38
      %p40 = scmp.ne.s32.totalorder %s29, %s30
      %p41 = scmp.eq.s32.totalorder %s21, 0
      %p42 = por %p40, %p41
      %p43 = scmp.ne.s32.totalorder %s29, %s30
      %p44 = scmp.eq.s32.totalorder %s22, 1
      %p45 = por %p43, %p44
      %p47 = scmp.ne.s32.totalorder %s30, %s46
      %p48 = scmp.eq.s32.totalorder %s22, 0
      %p49 = por %p47, %p48
      %s51 = sadd.s32 %s50, 1
      %p54 = scmp.eq.s32.totalorder %s16, 1
      %p55 = scmp.ne.s32.totalorder %s50, %s52
      %p56 = scmp.eq.s32.totalorder %s16, 0
      %p57 = por %p55, %p56
      %p58 = scmp.ne.s32.totalorder %s50, %s52
      %p59 = scmp.eq.s32.totalorder %s21, 1
      %p60 = por %p58, %p59
      %p61 = scmp.ne.s32.totalorder %s52, %s53
      %p62 = scmp.eq.s32.totalorder %s21, 0
      %p63 = por %p61, %p62
      %p64 = scmp.ne.s32.totalorder %s52, %s53
      %p65 = scmp.eq.s32.totalorder %s22, 1
      %p66 = por %p64, %p65
      %p68 = scmp.ne.s32.totalorder %s53, %s67
      %p69 = scmp.eq.s32.totalorder %s22, 0
      %p70 = por %p68, %p69
      %s72 = sadd.s32 %s71, 1
      %p75 = scmp.eq.s32.totalorder %s16, 1
      %p76 = scmp.ne.s32.totalorder %s71, %s73
      %p77 = scmp.eq.s32.totalorder %s16, 0
      %p78 = por %p76, %p77
      %p79 = scmp.ne.s32.totalorder %s71, %s73
      %p80 = scmp.eq.s32.totalorder %s21, 1
      %p81 = por %p79, %p80
      %p82 = scmp.ne.s32.totalorder %s73, %s74
      %p83 = scmp.eq.s32.totalorder %s21, 0
      %p84 = por %p82, %p83
      %p85 = scmp.ne.s32.totalorder %s73, %s74
      %p86 = scmp.eq.s32.totalorder %s22, 1
      %p87 = por %p85, %p86
      %p89 = scmp.ne.s32.totalorder %s74, %s88
      %p90 = scmp.eq.s32.totalorder %s22, 0
      %p91 = por %p89, %p90
      %s93 = sadd.s32 %s92, 1
      %p96 = scmp.eq.s32.totalorder %s16, 1
      %p97 = scmp.ne.s32.totalorder %s92, %s94
      %p98 = scmp.eq.s32.totalorder %s16, 0
      %p99 = por %p97, %p98
      %p100 = scmp.ne.s32.totalorder %s92, %s94
      %p101 = scmp.eq.s32.totalorder %s21, 1
      %p102 = por %p100, %p101
      %p103 = scmp.ne.s32.totalorder %s94, %s95
      %p104 = scmp.eq.s32.totalorder %s21, 0
      %p105 = por %p103, %p104
      %p106 = scmp.ne.s32.totalorder %s94, %s95
      %p107 = scmp.eq.s32.totalorder %s22, 1
      %p108 = por %p106, %p107
      %p110 = scmp.ne.s32.totalorder %s95, %s109
      %p111 = scmp.eq.s32.totalorder %s22, 0
      %p112 = por %p110, %p111
      %s114 = sadd.s32 %s113, 1
      %p117 = scmp.eq.s32.totalorder %s16, 1
      %p118 = scmp.ne.s32.totalorder %s113, %s115
      %p119 = scmp.eq.s32.totalorder %s16, 0
      %p120 = por %p118, %p119
      %p121 = scmp.ne.s32.totalorder %s113, %s115
      %p122 = scmp.eq.s32.totalorder %s21, 1
      %p123 = por %p121, %p122
      %p124 = scmp.ne.s32.totalorder %s115, %s116
      %p125 = scmp.eq.s32.totalorder %s21, 0
      %p126 = por %p124, %p125
      %p127 = scmp.ne.s32.totalorder %s115, %s116
      %p128 = scmp.eq.s32.totalorder %s22, 1
      %p129 = por %p127, %p128
      %p131 = scmp.ne.s32.totalorder %s116, %s130
      %p132 = scmp.eq.s32.totalorder %s22, 0
      %p133 = por %p131, %p132
      %s134 = ssub.s32 %s16, %s23
      %p135 = scmp.eq.s32.totalorder %s134, 0
      %s137 = sadd.s32 %s136, 1
      %s138 = scalar_select %p135, %s136, %s137
      %p141 = pneg %p135
      %p142 = scmp.eq.s32.totalorder %s16, 1
      %p143 = por %p141, %p142
      %p144 = scmp.ne.s32.totalorder %s136, %s139
      %p145 = scmp.eq.s32.totalorder %s16, 0
      %p146 = por %p144, %p145
      %p147 = scmp.ne.s32.totalorder %s136, %s139
      %p148 = scmp.eq.s32.totalorder %s21, 1
      %p149 = por %p147, %p148
      %p150 = scmp.ne.s32.totalorder %s139, %s140
      %p151 = scmp.eq.s32.totalorder %s21, 0
      %p152 = por %p150, %p151
      %p153 = scmp.ne.s32.totalorder %s139, %s140
      %p154 = scmp.eq.s32.totalorder %s22, 1
      %p155 = por %p153, %p154
      %p157 = scmp.ne.s32.totalorder %s140, %s156
      %p158 = scmp.eq.s32.totalorder %s22, 0
      %p159 = por %p157, %p158
      %p160 = scmp.le.s32.totalorder 1, %s16
      %p161 = scmp.lt.s32.totalorder %s16, 3
      %p162 = pnand %p160, %p161
      %p163 = pneg %p162
      // Predicated region
      $region9: #{tpu_custom_call.1} parent=5 // pred_check
        _
      $region10: #{tpu_custom_call.1} parent=5 // pred_check_branch
        %165 = sbr.rel (%p162) target = $region12
      $region11: #{tpu_custom_call.1} parent=5 // pred_region
        %s166 = ssub.s32 %s16, 1
        // Predicated region
        $region13: #{tpu_custom_call.1} parent=11 // pred_check
          %p167 = pneg %p63
        $region14: #{tpu_custom_call.1} parent=11 // pred_check_branch
          %169 = sbr.rel (%p167) target = $region16
        $region15: #{tpu_custom_call.1} parent=11 // pred_region
          %s171 = ssub.s32 6144, 6144
          %172 = vsyncadd [#allocation3], %s171
          %s173 = sshll.u32 [#allocation2], 4
          %s174 = int_to_ptr.vmem [resolvable:$true] %s173
          %179 = dma.hbm_to_vmem [thread:$0]  %s1, 6144, %s174, [#allocation3], 384, 384, 24
        $region16: #{tpu_custom_call.1} parent=11 // pred_fallthru
          _
        // Predicated region
        $region17: #{tpu_custom_call.1} parent=11 // pred_check
          %p180 = pneg %p84
        $region18: #{tpu_custom_call.1} parent=11 // pred_check_branch
          %182 = sbr.rel (%p180) target = $region20
        $region19: #{tpu_custom_call.1} parent=11 // pred_region
          _
        $region20: #{tpu_custom_call.1} parent=11 // pred_fallthru
          _
        // Predicated region
        $region21: #{tpu_custom_call.1} parent=11 // pred_check
          %p183 = pneg %p105
        $region22: #{tpu_custom_call.1} parent=11 // pred_check_branch
          %185 = sbr.rel (%p183) target = $region24
        $region23: #{tpu_custom_call.1} parent=11 // pred_region
          %s187 = ssub.s32 6144, 6144
          %188 = vsyncadd [#allocation6], %s187
          %s189 = sshll.u32 [#allocation5], 4
          %s190 = int_to_ptr.vmem [resolvable:$true] %s189
          %195 = dma.hbm_to_vmem [thread:$0]  %s3, 6144, %s190, [#allocation6], 384, 384, 24
        $region24: #{tpu_custom_call.1} parent=11 // pred_fallthru
          _
        // Predicated region
        $region25: #{tpu_custom_call.1} parent=11 // pred_check
          %p196 = pneg %p126
        $region26: #{tpu_custom_call.1} parent=11 // pred_check_branch
          %198 = sbr.rel (%p196) target = $region28
        $region27: #{tpu_custom_call.1} parent=11 // pred_region
          _
        $region28: #{tpu_custom_call.1} parent=11 // pred_fallthru
          _
      $region12: #{tpu_custom_call.1} parent=5 // pred_fallthru
        _
      %p199 = scmp.lt.s32.totalorder %s16, 2
      // Predicated region
      $region29: #{tpu_custom_call.1} parent=5 // pred_check
        %p200 = pneg %p199
      $region30: #{tpu_custom_call.1} parent=5 // pred_check_branch
        %202 = sbr.rel (%p200) target = $region32
      $region31: #{tpu_custom_call.1} parent=5 // pred_region
        // Predicated region
        $region33: #{tpu_custom_call.1} parent=31 // pred_check
          %p203 = pneg %p36
        $region34: #{tpu_custom_call.1} parent=31 // pred_check_branch
          %205 = sbr.rel (%p203) target = $region36
        $region35: #{tpu_custom_call.1} parent=31 // pred_region
          %p206 = scmp.lt.s32.totalorder %s16, 1
          %s207 = scalar_select %p206, %s16, 1
          %s208 = smul.addr %s207, 3
          %s209 = smul.addr %s208, 8
          %s210 = scalar_lea.vmem %s0, %s209
        $region36: #{tpu_custom_call.1} parent=31 // pred_fallthru
          _
      $region32: #{tpu_custom_call.1} parent=5 // pred_fallthru
        _
      %p211 = scmp.le.s32.totalorder 1, %s16
      %p212 = scmp.lt.s32.totalorder %s16, 3
      %p213 = pnand %p211, %p212
      %p214 = pneg %p213
      // Predicated region
      $region37: #{tpu_custom_call.1} parent=5 // pred_check
        _
      $region38: #{tpu_custom_call.1} parent=5 // pred_check_branch
        %216 = sbr.rel (%p213) target = $region40
      $region39: #{tpu_custom_call.1} parent=5 // pred_region
        %s217 = ssub.s32 %s16, 1
        // Predicated region
        $region41: #{tpu_custom_call.1} parent=39 // pred_check
          %p218 = pneg %p63
        $region42: #{tpu_custom_call.1} parent=39 // pred_check_branch
          %220 = sbr.rel (%p218) target = $region44
        $region43: #{tpu_custom_call.1} parent=39 // pred_region
          %221 = dma.done [#allocation3], 6144
        $region44: #{tpu_custom_call.1} parent=39 // pred_fallthru
          _
        // Predicated region
        $region45: #{tpu_custom_call.1} parent=39 // pred_check
          %p222 = pneg %p105
        $region46: #{tpu_custom_call.1} parent=39 // pred_check_branch
          %224 = sbr.rel (%p222) target = $region48
        $region47: #{tpu_custom_call.1} parent=39 // pred_region
          %225 = dma.done [#allocation6], 6144
        $region48: #{tpu_custom_call.1} parent=39 // pred_fallthru
          _
        %p226 = scmp.lt.s32.totalorder %s21, 1
        %s227 = scalar_select %p226, %s21, 1
        %s228 = smul.addr %s227, 3
        %s229 = smul.addr %s228, 8
        %s230 = scalar_lea.vmem %s0, %s229
        %p231 = pneg %p42
        %p232 = pneg %p39
        %p233 = pneg %p63
        %p234 = pneg %p60
        %p235 = pneg %p84
        %p236 = pneg %p81
        %p237 = pneg %p105
        %p238 = pneg %p102
        %p239 = pneg %p126
        %p240 = pneg %p123
        %p241 = pneg %p152
        %p242 = pneg %p149
        %s243 = sand.u32 %s139, 1
        %s244 = scalar_lea.sflag [#allocation4], %s243
        %s245 = sand.u32 %s139, 1
        %s246 = smul.addr %s245, 16
        %s247 = scalar_lea.vmem [#allocation7], %s246
        %p248 = scmp.lt.s32.totalorder %s21, 1
        %s249 = scalar_select %p248, %s21, 1
        %s250 = smul.addr %s249, 3
        %s251 = smul.addr %s250, 8
        %s252 = scalar_lea.vmem %s0, %s251
        %v253 = vld [vmem:[%s252] sm:$0xff]
        %v254 = vld [vmem:[%s252 + $0x8] sm:$0xff]
        %v255 = vld [vmem:[%s252 + $0x10] sm:$0xf]
        %v256 = vld [vmem:[#allocation2] sm:$0xff]
        %v257 = vld [vmem:[#allocation2 + $0x8] sm:$0xff]
        %v258 = vld [vmem:[#allocation2 + $0x10] sm:$0xff]
        %v259 = vld [vmem:[#allocation2 + $0x18] sm:$0xff]
        %v260 = vld [vmem:[#allocation2 + $0x20] sm:$0xff]
        %v261 = vld [vmem:[#allocation2 + $0x28] sm:$0xff]
        %v262 = vld [vmem:[#allocation2 + $0x30] sm:$0xff]
        %v263 = vld [vmem:[#allocation2 + $0x38] sm:$0xff]
        %v264 = vld [vmem:[#allocation2 + $0x40] sm:$0xff]
        %v265 = vld [vmem:[#allocation2 + $0x48] sm:$0xff]
        %v266 = vld [vmem:[#allocation2 + $0x50] sm:$0xff]
        %v267 = vld [vmem:[#allocation2 + $0x58] sm:$0xff]
        %v268 = vld [vmem:[#allocation2 + $0x60] sm:$0xff]
        %v269 = vld [vmem:[#allocation2 + $0x68] sm:$0xff]
        %v270 = vld [vmem:[#allocation2 + $0x70] sm:$0xff]
        %v271 = vld [vmem:[#allocation2 + $0x78] sm:$0xff]
        %v272 = vld [vmem:[#allocation2 + $0x80] sm:$0xff]
        %v273 = vld [vmem:[#allocation2 + $0x88] sm:$0xff]
        %v274 = vld [vmem:[#allocation2 + $0x90] sm:$0xff]
        %v275 = vld [vmem:[#allocation2 + $0x98] sm:$0xff]
        %v276 = vld [vmem:[#allocation2 + $0xa0] sm:$0xff]
        %v277 = vld [vmem:[#allocation2 + $0xa8] sm:$0xff]
        %v278 = vld [vmem:[#allocation2 + $0xb0] sm:$0xff]
        %v279 = vld [vmem:[#allocation2 + $0xb8] sm:$0xff]
        %v280 = vld [vmem:[#allocation2 + $0xc0] sm:$0xff]
        %v281 = vld [vmem:[#allocation2 + $0xc8] sm:$0xff]
        %v282 = vld [vmem:[#allocation2 + $0xd0] sm:$0xff]
        %v283 = vld [vmem:[#allocation2 + $0xd8] sm:$0xff]
        %v284 = vld [vmem:[#allocation2 + $0xe0] sm:$0xff]
        %v285 = vld [vmem:[#allocation2 + $0xe8] sm:$0xff]
        %v286 = vld [vmem:[#allocation2 + $0xf0] sm:$0xff]
        %v287 = vld [vmem:[#allocation2 + $0xf8] sm:$0xff]
        %v288 = vld [vmem:[#allocation2 + $0x100] sm:$0xff]
        %v289 = vld [vmem:[#allocation2 + $0x108] sm:$0xff]
        %v290 = vld [vmem:[#allocation2 + $0x110] sm:$0xff]
        %v291 = vld [vmem:[#allocation2 + $0x118] sm:$0xff]
        %v292 = vld [vmem:[#allocation2 + $0x120] sm:$0xff]
        %v293 = vld [vmem:[#allocation2 + $0x128] sm:$0xff]
        %v294 = vld [vmem:[#allocation2 + $0x130] sm:$0xff]
        %v295 = vld [vmem:[#allocation2 + $0x138] sm:$0xff]
        %v296 = vld [vmem:[#allocation2 + $0x140] sm:$0xff]
        %v297 = vld [vmem:[#allocation2 + $0x148] sm:$0xff]
        %v298 = vld [vmem:[#allocation2 + $0x150] sm:$0xff]
        %v299 = vld [vmem:[#allocation2 + $0x158] sm:$0xff]
        %v300 = vld [vmem:[#allocation2 + $0x160] sm:$0xff]
        %v301 = vld [vmem:[#allocation2 + $0x168] sm:$0xff]
        %v302 = vld [vmem:[#allocation2 + $0x170] sm:$0xff]
        %v303 = vld [vmem:[#allocation2 + $0x178] sm:$0xff]
        %304 = vmatprep.subr.mxu0 %v257
        %305 = vmatpush1.msra.mxu0 %v256
        %306 = vmatprep.subr.mxu0 %v260
        %307 = vmatpush1.msra.mxu0 %v259
        %308 = vmatprep.subr.mxu0 %v263
        %309 = vmatpush1.msra.mxu0 %v262
        %310 = vmatprep.subr.mxu0 %v266
        %311 = vmatpush1.msra.mxu0 %v265
        %312 = vmatprep.subr.mxu0 %v269
        %313 = vmatpush1.msra.mxu0 %v268
        %314 = vmatprep.subr.mxu0 %v272
        %315 = vmatpush1.msra.mxu0 %v271
        %316 = vmatprep.subr.mxu0 %v275
        %317 = vmatpush1.msra.mxu0 %v274
        %318 = vmatprep.subr.mxu0 %v278
        %319 = vmatpush1.msra.mxu0 %v277
        %320 = vmatprep.subr.mxu0 %v281
        %321 = vmatpush1.msra.mxu0 %v280
        %322 = vmatprep.subr.mxu0 %v284
        %323 = vmatpush1.msra.mxu0 %v283
        %324 = vmatprep.subr.mxu0 %v287
        %325 = vmatpush1.msra.mxu0 %v286
        %326 = vmatprep.subr.mxu0 %v290
        %327 = vmatpush1.msra.mxu0 %v289
        %328 = vmatprep.subr.mxu0 %v293
        %329 = vmatpush1.msra.mxu0 %v292
        %330 = vmatprep.subr.mxu0 %v296
        %331 = vmatpush1.msra.mxu0 %v295
        %332 = vmatprep.subr.mxu0 %v299
        %333 = vmatpush1.msra.mxu0 %v298
        %334 = vmatprep.subr.mxu0 %v302
        %335 = vmatpush1.msra.mxu0 %v301
        %336 = vmatprep.subr.mxu0 0.0
        %337 = vmatpush1.msra.mxu0 0.0
        %338 = vmatprep.subr.mxu0 0.0
        %339 = vmatpush1.msra.mxu0 0.0
        %340 = vmatprep.subr.mxu0 0.0
        %341 = vmatpush1.msra.mxu0 0.0
        %342 = vmatprep.subr.mxu0 0.0
        %343 = vmatpush1.msra.mxu0 0.0
        %344 = vmatprep.subr.mxu0 0.0
        %345 = vmatpush1.msra.mxu0 0.0
        %346 = vmatprep.subr.mxu0 0.0
        %347 = vmatpush1.msra.mxu0 0.0
        %348 = vmatprep.subr.mxu0 0.0
        %349 = vmatpush1.msra.mxu0 0.0
        %350 = vmatprep.subr.mxu0 0.0
        %351 = vmatpush1.msra.mxu0 0.0
        %352 = vmatprep.subr.mxu0 0.0
        %353 = vmatpush1.msra.mxu0 0.0
        %354 = vmatprep.subr.mxu0 0.0
        %355 = vmatpush1.msra.mxu0 0.0
        %356 = vmatprep.subr.mxu0 0.0
        %357 = vmatpush1.msra.mxu0 0.0
        %358 = vmatprep.subr.mxu0 0.0
        %359 = vmatpush1.msra.mxu0 0.0
        %360 = vmatprep.subr.mxu0 0.0
        %361 = vmatpush1.msra.mxu0 0.0
        %362 = vmatprep.subr.mxu0 0.0
        %363 = vmatpush1.msra.mxu0 0.0
        %364 = vmatprep.subr.mxu0 0.0
        %365 = vmatpush1.msra.mxu0 0.0
        %366 = vmatprep.subr.mxu0 0.0
        %367 = vmatpush1.msra.mxu0 0.0
        %368 = vmatprep.mubr.f32.mxu0 0.0
        %369 = vmatmul.mubr.f32.gmra.mrb[0].mxu0 %v253
        %v370 = vpop.f32.mrb[0].mxu0
        %v371 = vadd.f32 0.0, %v370
        %v372 = vpop.f32.mrb[0].mxu0
        %v373 = vadd.f32 0.0, %v372
        %374 = vmatprep.mubr.f32.mxu0 0.0
        %375 = vmatmul.mubr.f32.gmra.mrb[0].mxu0 %v254
        %v376 = vpop.f32.mrb[0].mxu0
        %v377 = vadd.f32 0.0, %v376
        %v378 = vpop.f32.mrb[0].mxu0
        %v379 = vadd.f32 0.0, %v378
        %380 = vmatprep.mubr.f32.mxu0 0.0
        %381 = vmatmul.mubr.f32.gmra.mrb[0].mxu0 %v255
        %v382 = vpop.f32.mrb[0].mxu0
        %v383 = vadd.f32 0.0, %v382
        %v384 = vpop.f32.mrb[0].mxu0
        %v385 = vadd.f32 0.0, %v384
        %386 = vdwg.mxu0
        %387 = vmatprep.subr.mxu0 0.0
        %388 = vmatpush1.msra.mxu0 %v258
        %389 = vmatprep.subr.mxu0 0.0
        %390 = vmatpush1.msra.mxu0 %v261
        %391 = vmatprep.subr.mxu0 0.0
        %392 = vmatpush1.msra.mxu0 %v264
        %393 = vmatprep.subr.mxu0 0.0
        %394 = vmatpush1.msra.mxu0 %v267
        %395 = vmatprep.subr.mxu0 0.0
        %396 = vmatpush1.msra.mxu0 %v270
        %397 = vmatprep.subr.mxu0 0.0
        %398 = vmatpush1.msra.mxu0 %v273
        %399 = vmatprep.subr.mxu0 0.0
        %400 = vmatpush1.msra.mxu0 %v276
        %401 = vmatprep.subr.mxu0 0.0
        %402 = vmatpush1.msra.mxu0 %v279
        %403 = vmatprep.subr.mxu0 0.0
        %404 = vmatpush1.msra.mxu0 %v282
        %405 = vmatprep.subr.mxu0 0.0
        %406 = vmatpush1.msra.mxu0 %v285
        %407 = vmatprep.subr.mxu0 0.0
        %408 = vmatpush1.msra.mxu0 %v288
        %409 = vmatprep.subr.mxu0 0.0
        %410 = vmatpush1.msra.mxu0 %v291
        %411 = vmatprep.subr.mxu0 0.0
        %412 = vmatpush1.msra.mxu0 %v294
        %413 = vmatprep.subr.mxu0 0.0
        %414 = vmatpush1.msra.mxu0 %v297
        %415 = vmatprep.subr.mxu0 0.0
        %416 = vmatpush1.msra.mxu0 %v300
        %417 = vmatprep.subr.mxu0 0.0
        %418 = vmatpush1.msra.mxu0 %v303
        %419 = vmatprep.subr.mxu0 0.0
        %420 = vmatpush1.msra.mxu0 0.0
        %421 = vmatprep.subr.mxu0 0.0
        %422 = vmatpush1.msra.mxu0 0.0
        %423 = vmatprep.subr.mxu0 0.0
        %424 = vmatpush1.msra.mxu0 0.0
        %425 = vmatprep.subr.mxu0 0.0
        %426 = vmatpush1.msra.mxu0 0.0
        %427 = vmatprep.subr.mxu0 0.0
        %428 = vmatpush1.msra.mxu0 0.0
        %429 = vmatprep.subr.mxu0 0.0
        %430 = vmatpush1.msra.mxu0 0.0
        %431 = vmatprep.subr.mxu0 0.0
        %432 = vmatpush1.msra.mxu0 0.0
        %433 = vmatprep.subr.mxu0 0.0
        %434 = vmatpush1.msra.mxu0 0.0
        %435 = vmatprep.subr.mxu0 0.0
        %436 = vmatpush1.msra.mxu0 0.0
        %437 = vmatprep.subr.mxu0 0.0
        %438 = vmatpush1.msra.mxu0 0.0
        %439 = vmatprep.subr.mxu0 0.0
        %440 = vmatpush1.msra.mxu0 0.0
        %441 = vmatprep.subr.mxu0 0.0
        %442 = vmatpush1.msra.mxu0 0.0
        %443 = vmatprep.subr.mxu0 0.0
        %444 = vmatpush1.msra.mxu0 0.0
        %445 = vmatprep.subr.mxu0 0.0
        %446 = vmatpush1.msra.mxu0 0.0
        %447 = vmatprep.subr.mxu0 0.0
        %448 = vmatpush1.msra.mxu0 0.0
        %449 = vmatprep.subr.mxu0 0.0
        %450 = vmatpush1.msra.mxu0 0.0
        %451 = vmatprep.mubr.f32.mxu0 0.0
        %452 = vmatmul.mubr.f32.gmra.mrb[0].mxu0 %v253
        %v453 = vpop.f32.mrb[0].mxu0
        %v454 = vadd.f32 0.0, %v453
        %v455 = vpop.f32.mrb[0].mxu0
        %456 = vmatprep.mubr.f32.mxu0 0.0
        %457 = vmatmul.mubr.f32.gmra.mrb[0].mxu0 %v254
        %v458 = vpop.f32.mrb[0].mxu0
        %v459 = vadd.f32 0.0, %v458
        %v460 = vpop.f32.mrb[0].mxu0
        %461 = vmatprep.mubr.f32.mxu0 0.0
        %462 = vmatmul.mubr.f32.gmra.mrb[0].mxu0 %v255
        %v463 = vpop.f32.mrb[0].mxu0
        %v464 = vadd.f32 0.0, %v463
        %v465 = vpop.f32.mrb[0].mxu0
        %466 = vdwg.mxu0
        %vm470 = vcmask 1046528
        %v471 = vrot.slane %v373, 1
        %v472 = vrot.slane %v379, 1
        %v473 = vsel %vm470, %v471, %v472
        %v474 = vrot.slane %v385, 1
        %v475 = vsel %vm470, %v472, %v474
        %v479 = vadd.f32 %v371, %v473
        %v480 = vadd.f32 %v377, %v475
        %v481 = vadd.f32 %v383, %v474
        %vm485 = vcmask 1045504
        %v486 = vrot.slane %v454, 2
        %v487 = vrot.slane %v459, 2
        %v488 = vsel %vm485, %v486, %v487
        %v489 = vrot.slane %v464, 2
        %v490 = vsel %vm485, %v487, %v489
        %v494 = vadd.f32 %v479, %v488
        %v495 = vadd.f32 %v480, %v490
        %v496 = vadd.f32 %v481, %v489
        %v497 = vld [vmem:[%s2] sm:$0x1]
        %v499 = vlaneseq
        %v500 = vshrl.u32 %v499, 7
        %v501 = vsub.s32 0, %v500
        %v502 = vrot.slane %v497, %v501
        %v504 = vadd.f32 %v494, %v502
        %v505 = vadd.f32 %v495, %v502
        %v506 = vadd.f32 %v496, %v502
        %v507 = vmax.f32 %v504, 0.0
        %v508 = vmax.f32 %v505, 0.0
        %v509 = vmax.f32 %v506, 0.0
        %v510 = vlaneseq
        %v511 = vshrl.u32 %v510, 7
        %v512 = vadd.s32 %v511, 8
        %v513 = vadd.s32 %v511, 16
        %vm514 = vcmp.ge.s32.totalorder %v511, 1
        %vm515 = vcmp.ge.s32.totalorder %v512, 1
        %vm516 = vcmp.ge.s32.totalorder %v513, 1
        %vm517 = vcmp.le.s32.totalorder %v511, 16
        %vm518 = vcmp.le.s32.totalorder %v512, 16
        %vm519 = vcmp.le.s32.totalorder %v513, 16
        %vm520 = vmand %vm514, %vm517
        %vm521 = vmand %vm515, %vm518
        %vm522 = vmand %vm516, %vm519
        %v523 = vsel %vm520, %v507, 0.0
        %v524 = vsel %vm521, %v508, 0.0
        %v525 = vsel %vm522, %v509, 0.0
        %v526 = vld [vmem:[#allocation5] sm:$0xff]
        %v527 = vld [vmem:[#allocation5 + $0x8] sm:$0xff]
        %v528 = vld [vmem:[#allocation5 + $0x10] sm:$0xff]
        %v529 = vld [vmem:[#allocation5 + $0x18] sm:$0xff]
        %v530 = vld [vmem:[#allocation5 + $0x20] sm:$0xff]
        %v531 = vld [vmem:[#allocation5 + $0x28] sm:$0xff]
        %v532 = vld [vmem:[#allocation5 + $0x30] sm:$0xff]
        %v533 = vld [vmem:[#allocation5 + $0x38] sm:$0xff]
        %v534 = vld [vmem:[#allocation5 + $0x40] sm:$0xff]
        %v535 = vld [vmem:[#allocation5 + $0x48] sm:$0xff]
        %v536 = vld [vmem:[#allocation5 + $0x50] sm:$0xff]
        %v537 = vld [vmem:[#allocation5 + $0x58] sm:$0xff]
        %v538 = vld [vmem:[#allocation5 + $0x60] sm:$0xff]
        %v539 = vld [vmem:[#allocation5 + $0x68] sm:$0xff]
        %v540 = vld [vmem:[#allocation5 + $0x70] sm:$0xff]
        %v541 = vld [vmem:[#allocation5 + $0x78] sm:$0xff]
        %v542 = vld [vmem:[#allocation5 + $0x80] sm:$0xff]
        %v543 = vld [vmem:[#allocation5 + $0x88] sm:$0xff]
        %v544 = vld [vmem:[#allocation5 + $0x90] sm:$0xff]
        %v545 = vld [vmem:[#allocation5 + $0x98] sm:$0xff]
        %v546 = vld [vmem:[#allocation5 + $0xa0] sm:$0xff]
        %v547 = vld [vmem:[#allocation5 + $0xa8] sm:$0xff]
        %v548 = vld [vmem:[#allocation5 + $0xb0] sm:$0xff]
        %v549 = vld [vmem:[#allocation5 + $0xb8] sm:$0xff]
        %v550 = vld [vmem:[#allocation5 + $0xc0] sm:$0xff]
        %v551 = vld [vmem:[#allocation5 + $0xc8] sm:$0xff]
        %v552 = vld [vmem:[#allocation5 + $0xd0] sm:$0xff]
        %v553 = vld [vmem:[#allocation5 + $0xd8] sm:$0xff]
        %v554 = vld [vmem:[#allocation5 + $0xe0] sm:$0xff]
        %v555 = vld [vmem:[#allocation5 + $0xe8] sm:$0xff]
        %v556 = vld [vmem:[#allocation5 + $0xf0] sm:$0xff]
        %v557 = vld [vmem:[#allocation5 + $0xf8] sm:$0xff]
        %v558 = vld [vmem:[#allocation5 + $0x100] sm:$0xff]
        %v559 = vld [vmem:[#allocation5 + $0x108] sm:$0xff]
        %v560 = vld [vmem:[#allocation5 + $0x110] sm:$0xff]
        %v561 = vld [vmem:[#allocation5 + $0x118] sm:$0xff]
        %v562 = vld [vmem:[#allocation5 + $0x120] sm:$0xff]
        %v563 = vld [vmem:[#allocation5 + $0x128] sm:$0xff]
        %v564 = vld [vmem:[#allocation5 + $0x130] sm:$0xff]
        %v565 = vld [vmem:[#allocation5 + $0x138] sm:$0xff]
        %v566 = vld [vmem:[#allocation5 + $0x140] sm:$0xff]
        %v567 = vld [vmem:[#allocation5 + $0x148] sm:$0xff]
        %v568 = vld [vmem:[#allocation5 + $0x150] sm:$0xff]
        %v569 = vld [vmem:[#allocation5 + $0x158] sm:$0xff]
        %v570 = vld [vmem:[#allocation5 + $0x160] sm:$0xff]
        %v571 = vld [vmem:[#allocation5 + $0x168] sm:$0xff]
        %v572 = vld [vmem:[#allocation5 + $0x170] sm:$0xff]
        %v573 = vld [vmem:[#allocation5 + $0x178] sm:$0xff]
        %574 = vmatprep.subr.mxu0 %v527
        %575 = vmatpush1.msra.mxu0 %v526
        %576 = vmatprep.subr.mxu0 %v530
        %577 = vmatpush1.msra.mxu0 %v529
        %578 = vmatprep.subr.mxu0 %v533
        %579 = vmatpush1.msra.mxu0 %v532
        %580 = vmatprep.subr.mxu0 %v536
        %581 = vmatpush1.msra.mxu0 %v535
        %582 = vmatprep.subr.mxu0 %v539
        %583 = vmatpush1.msra.mxu0 %v538
        %584 = vmatprep.subr.mxu0 %v542
        %585 = vmatpush1.msra.mxu0 %v541
        %586 = vmatprep.subr.mxu0 %v545
        %587 = vmatpush1.msra.mxu0 %v544
        %588 = vmatprep.subr.mxu0 %v548
        %589 = vmatpush1.msra.mxu0 %v547
        %590 = vmatprep.subr.mxu0 %v551
        %591 = vmatpush1.msra.mxu0 %v550
        %592 = vmatprep.subr.mxu0 %v554
        %593 = vmatpush1.msra.mxu0 %v553
        %594 = vmatprep.subr.mxu0 %v557
        %595 = vmatpush1.msra.mxu0 %v556
        %596 = vmatprep.subr.mxu0 %v560
        %597 = vmatpush1.msra.mxu0 %v559
        %598 = vmatprep.subr.mxu0 %v563
        %599 = vmatpush1.msra.mxu0 %v562
        %600 = vmatprep.subr.mxu0 %v566
        %601 = vmatpush1.msra.mxu0 %v565
        %602 = vmatprep.subr.mxu0 %v569
        %603 = vmatpush1.msra.mxu0 %v568
        %604 = vmatprep.subr.mxu0 %v572
        %605 = vmatpush1.msra.mxu0 %v571
        %606 = vmatprep.subr.mxu0 0.0
        %607 = vmatpush1.msra.mxu0 0.0
        %608 = vmatprep.subr.mxu0 0.0
        %609 = vmatpush1.msra.mxu0 0.0
        %610 = vmatprep.subr.mxu0 0.0
        %611 = vmatpush1.msra.mxu0 0.0
        %612 = vmatprep.subr.mxu0 0.0
        %613 = vmatpush1.msra.mxu0 0.0
        %614 = vmatprep.subr.mxu0 0.0
        %615 = vmatpush1.msra.mxu0 0.0
        %616 = vmatprep.subr.mxu0 0.0
        %617 = vmatpush1.msra.mxu0 0.0
        %618 = vmatprep.subr.mxu0 0.0
        %619 = vmatpush1.msra.mxu0 0.0
        %620 = vmatprep.subr.mxu0 0.0
        %621 = vmatpush1.msra.mxu0 0.0
        %622 = vmatprep.subr.mxu0 0.0
        %623 = vmatpush1.msra.mxu0 0.0
        %624 = vmatprep.subr.mxu0 0.0
        %625 = vmatpush1.msra.mxu0 0.0
        %626 = vmatprep.subr.mxu0 0.0
        %627 = vmatpush1.msra.mxu0 0.0
        %628 = vmatprep.subr.mxu0 0.0
        %629 = vmatpush1.msra.mxu0 0.0
        %630 = vmatprep.subr.mxu0 0.0
        %631 = vmatpush1.msra.mxu0 0.0
        %632 = vmatprep.subr.mxu0 0.0
        %633 = vmatpush1.msra.mxu0 0.0
        %634 = vmatprep.subr.mxu0 0.0
        %635 = vmatpush1.msra.mxu0 0.0
        %636 = vmatprep.subr.mxu0 0.0
        %637 = vmatpush1.msra.mxu0 0.0
        %638 = vmatprep.mubr.f32.mxu0 0.0
        %639 = vmatmul.mubr.f32.gmra.mrb[0].mxu0 %v523
        %v640 = vpop.f32.mrb[0].mxu0
        %v641 = vadd.f32 0.0, %v640
        %v642 = vpop.f32.mrb[0].mxu0
        %v643 = vadd.f32 0.0, %v642
        %644 = vmatprep.mubr.f32.mxu0 0.0
        %645 = vmatmul.mubr.f32.gmra.mrb[0].mxu0 %v524
        %v646 = vpop.f32.mrb[0].mxu0
        %v647 = vadd.f32 0.0, %v646
        %v648 = vpop.f32.mrb[0].mxu0
        %v649 = vadd.f32 0.0, %v648
        %650 = vmatprep.mubr.f32.mxu0 0.0
        %651 = vmatmul.mubr.f32.gmra.mrb[0].mxu0 %v525
        %v652 = vpop.f32.mrb[0].mxu0
        %v653 = vpop.f32.mrb[0].mxu0
        %v654 = vadd.f32 0.0, %v653
        %655 = vdwg.mxu0
        %656 = vmatprep.subr.mxu0 0.0
        %657 = vmatpush1.msra.mxu0 %v528
        %658 = vmatprep.subr.mxu0 0.0
        %659 = vmatpush1.msra.mxu0 %v531
        %660 = vmatprep.subr.mxu0 0.0
        %661 = vmatpush1.msra.mxu0 %v534
        %662 = vmatprep.subr.mxu0 0.0
        %663 = vmatpush1.msra.mxu0 %v537
        %664 = vmatprep.subr.mxu0 0.0
        %665 = vmatpush1.msra.mxu0 %v540
        %666 = vmatprep.subr.mxu0 0.0
        %667 = vmatpush1.msra.mxu0 %v543
        %668 = vmatprep.subr.mxu0 0.0
        %669 = vmatpush1.msra.mxu0 %v546
        %670 = vmatprep.subr.mxu0 0.0
        %671 = vmatpush1.msra.mxu0 %v549
        %672 = vmatprep.subr.mxu0 0.0
        %673 = vmatpush1.msra.mxu0 %v552
        %674 = vmatprep.subr.mxu0 0.0
        %675 = vmatpush1.msra.mxu0 %v555
        %676 = vmatprep.subr.mxu0 0.0
        %677 = vmatpush1.msra.mxu0 %v558
        %678 = vmatprep.subr.mxu0 0.0
        %679 = vmatpush1.msra.mxu0 %v561
        %680 = vmatprep.subr.mxu0 0.0
        %681 = vmatpush1.msra.mxu0 %v564
        %682 = vmatprep.subr.mxu0 0.0
        %683 = vmatpush1.msra.mxu0 %v567
        %684 = vmatprep.subr.mxu0 0.0
        %685 = vmatpush1.msra.mxu0 %v570
        %686 = vmatprep.subr.mxu0 0.0
        %687 = vmatpush1.msra.mxu0 %v573
        %688 = vmatprep.subr.mxu0 0.0
        %689 = vmatpush1.msra.mxu0 0.0
        %690 = vmatprep.subr.mxu0 0.0
        %691 = vmatpush1.msra.mxu0 0.0
        %692 = vmatprep.subr.mxu0 0.0
        %693 = vmatpush1.msra.mxu0 0.0
        %694 = vmatprep.subr.mxu0 0.0
        %695 = vmatpush1.msra.mxu0 0.0
        %696 = vmatprep.subr.mxu0 0.0
        %697 = vmatpush1.msra.mxu0 0.0
        %698 = vmatprep.subr.mxu0 0.0
        %699 = vmatpush1.msra.mxu0 0.0
        %700 = vmatprep.subr.mxu0 0.0
        %701 = vmatpush1.msra.mxu0 0.0
        %702 = vmatprep.subr.mxu0 0.0
        %703 = vmatpush1.msra.mxu0 0.0
        %704 = vmatprep.subr.mxu0 0.0
        %705 = vmatpush1.msra.mxu0 0.0
        %706 = vmatprep.subr.mxu0 0.0
        %707 = vmatpush1.msra.mxu0 0.0
        %708 = vmatprep.subr.mxu0 0.0
        %709 = vmatpush1.msra.mxu0 0.0
        %710 = vmatprep.subr.mxu0 0.0
        %711 = vmatpush1.msra.mxu0 0.0
        %712 = vmatprep.subr.mxu0 0.0
        %713 = vmatpush1.msra.mxu0 0.0
        %714 = vmatprep.subr.mxu0 0.0
        %715 = vmatpush1.msra.mxu0 0.0
        %716 = vmatprep.subr.mxu0 0.0
        %717 = vmatpush1.msra.mxu0 0.0
        %718 = vmatprep.subr.mxu0 0.0
        %719 = vmatpush1.msra.mxu0 0.0
        %720 = vmatprep.mubr.f32.mxu0 0.0
        %721 = vmatmul.mubr.f32.gmra.mrb[0].mxu0 %v523
        %v722 = vpop.f32.mrb[0].mxu0
        %v723 = vadd.f32 0.0, %v722
        %v724 = vpop.f32.mrb[0].mxu0
        %725 = vmatprep.mubr.f32.mxu0 0.0
        %726 = vmatmul.mubr.f32.gmra.mrb[0].mxu0 %v524
        %v727 = vpop.f32.mrb[0].mxu0
        %v728 = vadd.f32 0.0, %v727
        %v729 = vpop.f32.mrb[0].mxu0
        %730 = vmatprep.mubr.f32.mxu0 0.0
        %731 = vmatmul.mubr.f32.gmra.mrb[0].mxu0 %v525
        %v732 = vpop.f32.mrb[0].mxu0
        %v733 = vadd.f32 0.0, %v732
        %v734 = vpop.f32.mrb[0].mxu0
        %735 = vdwg.mxu0
        %v739 = vrot.slane %v643, 1
        %v740 = vrot.slane %v649, 1
        %v741 = vsel %vm470, %v739, %v740
        %v742 = vrot.slane %v654, 1
        %v743 = vsel %vm470, %v740, %v742
        %v746 = vadd.f32 %v641, %v741
        %v747 = vadd.f32 %v647, %v743
        %v751 = vrot.slane %v723, 2
        %v752 = vrot.slane %v728, 2
        %v753 = vsel %vm485, %v751, %v752
        %v754 = vrot.slane %v733, 2
        %v755 = vsel %vm485, %v752, %v754
        %v758 = vadd.f32 %v746, %v753
        %v759 = vadd.f32 %v747, %v755
        %v760 = vld [vmem:[%s4] sm:$0x1]
        %v762 = vlaneseq
        %v763 = vshrl.u32 %v762, 7
        %v764 = vsub.s32 0, %v763
        %v765 = vrot.slane %v760, %v764
        %v767 = vadd.f32 %v758, %v765
        %v768 = vadd.f32 %v759, %v765
        %v772 = vrot.slane %v253, 2
        %v773 = vrot.slane %v254, 2
        %v774 = vsel %vm485, %v772, %v773
        %v775 = vrot.slane %v255, 2
        %v776 = vsel %vm485, %v773, %v775
        %v779 = vadd.f32 %v767, %v774
        %v780 = vadd.f32 %v768, %v776
        %v781 = vmax.f32 %v779, 0.0
        %v782 = vmax.f32 %v780, 0.0
        %783 = vst [vmem:[%s247] sm:$0xff] %v781
        %784 = vst [vmem:[%s247 + $0x8] sm:$0xff] %v782
        %s785 = sand.u32 %s139, 1
        %s786 = scalar_lea.sflag [#allocation4], %s785
        %s787 = sand.u32 %s139, 1
        %s788 = smul.addr %s787, 16
        %s789 = scalar_lea.vmem [#allocation7], %s788
        // Predicated region
        $region49: #{tpu_custom_call.1} parent=39 // pred_check
          %p790 = pneg %p149
        $region50: #{tpu_custom_call.1} parent=39 // pred_check_branch
          %792 = sbr.rel (%p790) target = $region52
        $region51: #{tpu_custom_call.1} parent=39 // pred_region
          %s794 = ssub.s32 256, 256
          %795 = vsyncadd %s786, %s794
          %s796 = smul.addr %s21, 2
          %s797 = smul.addr %s796, 128
          %s798 = scalar_lea.hbm %s5, %s797
          %s799 = sshll.u32 %s789, 4
          %s800 = int_to_ptr.vmem [resolvable:$true] %s799
          %805 = dma.vmem_to_hbm [thread:$0]  %s800, 256, %s798, %s786, 128, 128, 8
        $region52: #{tpu_custom_call.1} parent=39 // pred_fallthru
          _
      $region40: #{tpu_custom_call.1} parent=5 // pred_fallthru
        _
      %p806 = scmp.le.s32.totalorder 2, %s16
      // Predicated region
      $region53: #{tpu_custom_call.1} parent=5 // pred_check
        %p807 = pneg %p806
      $region54: #{tpu_custom_call.1} parent=5 // pred_check_branch
        %809 = sbr.rel (%p807) target = $region56
      $region55: #{tpu_custom_call.1} parent=5 // pred_region
        %s810 = ssub.s32 %s16, 2
        // Predicated region
        $region57: #{tpu_custom_call.1} parent=55 // pred_check
          %p811 = pneg %p155
        $region58: #{tpu_custom_call.1} parent=55 // pred_check_branch
          %813 = sbr.rel (%p811) target = $region60
        $region59: #{tpu_custom_call.1} parent=55 // pred_region
          %s814 = sand.u32 %s140, 1
          %s815 = scalar_lea.sflag [#allocation4], %s814
          %s816 = sand.u32 %s140, 1
          %s817 = smul.addr %s816, 16
          %s818 = scalar_lea.vmem [#allocation7], %s817
          %819 = dma.done %s815, 256
        $region60: #{tpu_custom_call.1} parent=55 // pred_fallthru
          _
      $region56: #{tpu_custom_call.1} parent=5 // pred_fallthru
        _
    $region6: #{tpu_custom_call.1} parent=1 // loop_footer
      %s20 = sadd.s32 1, %s16
    $region7: #{tpu_custom_call.1} parent=1 // loop_footer_branch
      %15 = sbr.rel target = $region3
    $region8: #{tpu_custom_call.1} parent=1 // loop_exit
      _
    %820 = vsyncpa [#allocation3], 1
    %s821 = scalar_lea.sflag [#allocation3], 1
    %822 = vsyncpa %s821, 1
    %823 = vsyncpa [#allocation6], 1
    %824 = vsyncpa [#allocation4], 1
    %s825 = scalar_lea.sflag [#allocation4], 1
    %826 = vsyncpa %s825, 1

</llo_original>
